<compile_context>
chip_gen: v7x
topology: tpu7x:2x2x1
jax: 0.10.0
libtpu: 0.0.40
codegen_flags: <defaults>
</compile_context>

<pallas_src>
import math

import jax
import jax.numpy as jnp
from jax.experimental import pallas as pl
from jax.experimental.pallas import tpu as pltpu


# ----------------------------------------------------------------------------- helpers
def _round_up(x, m):
    return ((x + m - 1) // m) * m


def _pad2d(a, rows, cols, dtype=None):
    r, c = a.shape
    out = jnp.pad(a, ((0, rows - r), (0, cols - c)))
    return out if dtype is None else out.astype(dtype)


def _softplus(x):
    # Numerically stable softplus (matches torch.nn.functional.softplus).
    return jnp.maximum(x, 0.0) + jnp.log1p(jnp.exp(-jnp.abs(x)))


_K_SINGLE_TILE_MAX = 2048   # bf16 operands: above this, tile the reduction axis
_K_TILE = 512
_N_SINGLE_TILE_MAX = 512


def _tiling(M, K, N):
    """Choose padded sizes and tile sizes (all (8,128)-aligned)."""
    # K (reduction) axis.
    K_p = _round_up(K, 128)
    if K_p <= _K_SINGLE_TILE_MAX:
        tk = K_p
    else:
        tk = _K_TILE
        K_p = _round_up(K, tk)
    # N (out-channel) axis: one lane-dense tile when possible so the M x K patches
    # stream is read from HBM exactly once.
    N_p = _round_up(N, 128)
    if N_p <= _N_SINGLE_TILE_MAX:
        tn = N_p
    else:
        tn = 256
        N_p = _round_up(N, tn)
    # M (row) axis: bigger tiles when K is small to amortize per-grid-step overhead.
    if tk <= 512:
        tm_target = 1024
    elif tk <= 1024:
        tm_target = 512
    else:
        tm_target = 256
    tm = min(tm_target, _round_up(M, 8))
    M_p = _round_up(M, tm)
    return M_p, K_p, N_p, tm, tk, tn


def _matmul_vmem_bytes(tm, tk, tn):
    patches = tm * tk * 2 * 2      # bf16, double buffered
    weight = tk * tn * 2 * 2       # bf16, double buffered
    bias = tn * 4 * 2
    out = tm * tn * 4 * 2          # f32 output, double buffered
    acc = tm * tn * 4              # f32 accumulator scratch
    return int(patches + weight + bias + out + acc)


# ----------------------------------------------------------------------------- kernels
def _reparam_weight_kernel(mu_ref, rho_ref, eps_ref, w_ref):
    """w = mu + softplus(rho) * eps, computed in f32, stored as bf16 for the MXU."""
    w = mu_ref[...] + _softplus(rho_ref[...]) * eps_ref[...]
    w_ref[...] = w.astype(w_ref.dtype)


def _conv_mm_kernel(p_ref, w_ref, b_ref, o_ref, acc_ref):
    """grid = (i: M tiles [parallel], j: N tiles [parallel], k: K tiles [arbitrary])."""
    k = pl.program_id(2)

    @pl.when(k == 0)
    def _():
        acc_ref[...] = jnp.zeros_like(acc_ref)

    acc_ref[...] += jnp.dot(p_ref[...], w_ref[...],
                            preferred_element_type=jnp.float32)

    @pl.when(k == pl.num_programs(2) - 1)
    def _():
        o_ref[...] = (acc_ref[...] + b_ref[...]).astype(o_ref.dtype)


# ----------------------------------------------------------------------------- pallas wrappers
def _reparam_weight(mu_p, rho_p, eps_p):
    """Sample the weight with a tiny Pallas kernel over the padded (K_p, N_p) params."""
    K_p, N_p = mu_p.shape
    if K_p % 512 == 0:
        rk = 512
    elif K_p % 256 == 0:
        rk = 256
    else:
        rk = 128                      # K_p is always a multiple of 128
    rk = min(rk, K_p)
    est = int(rk * N_p * (3 * 4 + 2) * 2)

    return pl.pallas_call(
        _reparam_weight_kernel,
        out_shape=jax.ShapeDtypeStruct((K_p, N_p), jnp.bfloat16),
        grid_spec=pltpu.PrefetchScalarGridSpec(
            num_scalar_prefetch=0,
            grid=(K_p // rk,),
            in_specs=[pl.BlockSpec((rk, N_p), lambda i: (i, 0))] * 3,
            out_specs=pl.BlockSpec((rk, N_p), lambda i: (i, 0)),
        ),
        compiler_params=pltpu.CompilerParams(
            dimension_semantics=("parallel",),
            vmem_limit_bytes=min(64 << 20, max(16 << 20, 2 * est))),
        cost_estimate=pl.CostEstimate(
            flops=int(3 * K_p * N_p),
            transcendentals=int(2 * K_p * N_p),
            bytes_accessed=int(K_p * N_p * (3 * 4 + 2))),
    )(mu_p, rho_p, eps_p)


def _conv_matmul(p, w, b, out_dtype, tm, tk, tn):
    """out = p @ w + b, p: (M_p, K_p) bf16, w: (K_p, N_p) bf16, b: (1, N_p) f32."""
    M_p, K_p = p.shape
    _, N_p = w.shape
    grid = (M_p // tm, N_p // tn, K_p // tk)

    est = _matmul_vmem_bytes(tm, tk, tn)
    flops = int(2 * M_p * K_p * N_p)
    bytes_accessed = int(
        (N_p // tn) * M_p * K_p * 2      # patches (re-read once per N tile)
        + (M_p // tm) * K_p * N_p * 2    # weight (re-read once per M tile)
        + (M_p // tm) * N_p * 4          # bias
        + M_p * N_p * 4)                 # output

    return pl.pallas_call(
        _conv_mm_kernel,
        out_shape=jax.ShapeDtypeStruct((M_p, N_p), out_dtype),
        grid_spec=pltpu.PrefetchScalarGridSpec(
            num_scalar_prefetch=0,
            grid=grid,
            in_specs=[
                pl.BlockSpec((tm, tk), lambda i, j, k: (i, k)),   # im2col patches (bf16)
                pl.BlockSpec((tk, tn), lambda i, j, k: (k, j)),   # sampled weight (bf16, K x N)
                pl.BlockSpec((1, tn), lambda i, j, k: (0, j)),    # sampled bias (f32)
            ],
            out_specs=pl.BlockSpec((tm, tn), lambda i, j, k: (i, j)),
            scratch_shapes=[pltpu.VMEM((tm, tn), jnp.float32)],   # f32 accumulator
        ),
        compiler_params=pltpu.CompilerParams(
            dimension_semantics=("parallel", "parallel", "arbitrary"),
            vmem_limit_bytes=min(64 << 20, max(32 << 20, 2 * est))),
        cost_estimate=pl.CostEstimate(flops=flops, transcendentals=0,
                                      bytes_accessed=bytes_accessed),
    )(p, w, b)


# ----------------------------------------------------------------------------- module-level API
def bayes_conv2d(x, weight_mu, weight_rho, bias_mu, bias_rho,
                 *, stride=(1, 1), padding=(0, 0), dilation=(1, 1),
                 eps_w=None, eps_b=None, sample=True):
    """Bayesian conv2d forward (groups == 1)."""
    B, C_in, H, W = x.shape
    C_out, C_in_w, KH, KW = weight_mu.shape
    assert C_in_w == C_in  # TODO(synk): groups > 1 not supported

    K = C_in * KH * KW
    N = C_out

    # im2col in bf16 via XLA's patch extractor. Output channel order is (C, KH, KW)
    # flattened, matching weight_mu.reshape(C_out, C_in*KH*KW).
    patches = jax.lax.conv_general_dilated_patches(
        x.astype(jnp.bfloat16),
        filter_shape=(KH, KW),
        window_strides=tuple(stride),
        padding=[(padding[0], padding[0]), (padding[1], padding[1])],
        rhs_dilation=tuple(dilation))                    # (B, K, OH, OW)
    _, _, OH, OW = patches.shape
    patches2d = patches.transpose(0, 2, 3, 1).reshape(B * OH * OW, K)
    M = B * OH * OW

    M_p, K_p, N_p, tm, tk, tn = _tiling(M, K, N)
    p = _pad2d(patches2d, M_p, K_p)                      # already bf16

    wmu_t = weight_mu.reshape(C_out, K).T                # (K, N) lane-dense RHS layout
    if sample:
        wrho_t = weight_rho.reshape(C_out, K).T
        weps_t = eps_w.reshape(C_out, K).T
        w_bf16 = _reparam_weight(_pad2d(wmu_t, K_p, N_p),
                                 _pad2d(wrho_t, K_p, N_p),
                                 _pad2d(weps_t, K_p, N_p))
        b = bias_mu + _softplus(bias_rho) * eps_b        # O(C_out): done in plain f32 JAX
    else:
        # Eval path: mu only -> 1/3 of the weight traffic, zero transcendentals.
        w_bf16 = _pad2d(wmu_t, K_p, N_p, dtype=jnp.bfloat16)
        b = bias_mu
    b_p = _pad2d(b.reshape(1, C_out).astype(jnp.float32), 1, N_p)

    out2d = _conv_matmul(p, w_bf16, b_p, x.dtype, tm, tk, tn)[:M, :N]
    # TODO(synk): NHWC would avoid this transpose; kept to match the module's NCHW output.
    return out2d.reshape(B, OH, OW, C_out).transpose(0, 3, 1, 2)


def bayes_conv_forward(x, params, *, key=None, sample=True, training=False,
                       stride=(1, 1), dilation=(1, 1)):
    """Mirrors BayesConvLayer.forward (including its `padding = _pair(stride)` behaviour)."""
    weight_mu, weight_rho, bias_mu, bias_rho = params
    padding = stride  # the original module assigns padding = _pair(stride)
    do_sample = training or sample
    if do_sample:
        assert key is not None
        kw, kb = jax.random.split(key)
        eps_w = jax.random.normal(kw, weight_mu.shape, weight_mu.dtype)
        eps_b = jax.random.normal(kb, bias_mu.shape, bias_mu.dtype)
    else:
        eps_w = eps_b = None
    # TODO(synk): log_prior / log_variational_posterior side scalars are not computed here.
    return bayes_conv2d(x, weight_mu, weight_rho, bias_mu, bias_rho,
                        stride=stride, padding=padding, dilation=dilation,
                        eps_w=eps_w, eps_b=eps_b, sample=do_sample)


# ----------------------------------------------------------------------------- reference & demo
def _conv_ref(x, w, b, stride, padding, dilation):
    out = jax.lax.conv_general_dilated(
        x, w, window_strides=stride,
        padding=[(padding[0], padding[0]), (padding[1], padding[1])],
        rhs_dilation=dilation,
        dimension_numbers=("NCHW", "OIHW", "NCHW"),
        precision=jax.lax.Precision.HIGHEST)
    return out + b.reshape(1, -1, 1, 1)


def _bf16_round(a):
    return a.astype(jnp.bfloat16).astype(jnp.float32)


if __name__ == "__main__":
    B, C_IN, C_OUT, H, W, KS = 2, 4, 8, 16, 16, 3
    stride = (1, 1)
    dilation = (1, 1)
    padding = stride  # mirrors the module

    key = jax.random.PRNGKey(0)
    k1, k2, k3, k4, kx, ks = jax.random.split(key, 6)

    n = C_IN * KS * KS
    stdv = 1.0 / math.sqrt(n)
    weight_mu = jax.random.uniform(k1, (C_OUT, C_IN, KS, KS), jnp.float32, -stdv, stdv)
    weight_rho = jax.random.uniform(k2, (C_OUT, C_IN, KS, KS), jnp.float32, -5.0, -4.0)
    bias_mu = jax.random.uniform(k3, (C_OUT,), jnp.float32, -stdv, stdv)
    bias_rho = jax.random.uniform(k4, (C_OUT,), jnp.float32, -5.0, -4.0)
    params = (weight_mu, weight_rho, bias_mu, bias_rho)

    x = jax.random.normal(kx, (B, C_IN, H, W), jnp.float32)

    # 1) Eval path (sample=False, not training): weight = mu, bias = mu.
    out_eval = jax.block_until_ready(
        bayes_conv_forward(x, params, sample=False, training=False, stride=stride))
    ref_eval_bf16 = _conv_ref(_bf16_round(x), _bf16_round(weight_mu), bias_mu,
                              stride, padding, dilation)
    assert out_eval.shape == ref_eval_bf16.shape
    assert jnp.allclose(out_eval, ref_eval_bf16, atol=1e-2, rtol=1e-2), \
        float(jnp.max(jnp.abs(out_eval - ref_eval_bf16)))
    ref_eval_f32 = _conv_ref(x, weight_mu, bias_mu, stride, padding, dilation)
    assert jnp.allclose(out_eval, ref_eval_f32, atol=5e-2, rtol=5e-2), \
        float(jnp.max(jnp.abs(out_eval - ref_eval_f32)))

    # 2) Sample path: reparameterized weight/bias with deterministic noise from key `ks`.
    out_s = jax.block_until_ready(
        bayes_conv_forward(x, params, key=ks, sample=True, stride=stride))
    kw, kb = jax.random.split(ks)
    eps_w = jax.random.normal(kw, weight_mu.shape, jnp.float32)
    eps_b = jax.random.normal(kb, bias_mu.shape, jnp.float32)
    w_sampled = weight_mu + _softplus(weight_rho) * eps_w
    b_sampled = bias_mu + _softplus(bias_rho) * eps_b
    ref_s_bf16 = _conv_ref(_bf16_round(x), _bf16_round(w_sampled), b_sampled,
                           stride, padding, dilation)
    assert jnp.allclose(out_s, ref_s_bf16, atol=1e-2, rtol=1e-2), \
        float(jnp.max(jnp.abs(out_s - ref_s_bf16)))
    ref_s_f32 = _conv_ref(x, w_sampled, b_sampled, stride, padding, dilation)
    assert jnp.allclose(out_s, ref_s_f32, atol=5e-2, rtol=5e-2), \
        float(jnp.max(jnp.abs(out_s - ref_s_f32)))

    # 3) Strided config (stride=2 -> padding=(2,2) per the module) to exercise generality.
    out_s2 = jax.block_until_ready(
        bayes_conv_forward(x, params, key=ks, sample=True, stride=(2, 2)))
    ref_s2 = _conv_ref(_bf16_round(x), _bf16_round(w_sampled), b_sampled,
                       (2, 2), (2, 2), dilation)
    assert out_s2.shape == ref_s2.shape
    assert jnp.allclose(out_s2, ref_s2, atol=1e-2, rtol=1e-2), \
        float(jnp.max(jnp.abs(out_s2 - ref_s2)))

    print("KERNEL_OK")
</pallas_src>

<mosaic_0001>
module attributes {stable_mosaic.version = 11 : i64} {
  func.func @_conv_mm_kernel(%arg0: i32, %arg1: i32, %arg2: i32, %arg3: memref<512x128xbf16, #tpu.memory_space<vmem>>, %arg4: memref<128x128xbf16, #tpu.memory_space<vmem>>, %arg5: memref<1x128xf32, #tpu.memory_space<vmem>>, %arg6: memref<512x128xf32, #tpu.memory_space<vmem>>, %arg7: memref<512x128xf32, #tpu.memory_space<vmem>>) attributes {dimension_semantics = [#tpu.dimension_semantics<parallel>, #tpu.dimension_semantics<parallel>, #tpu.dimension_semantics<arbitrary>], iteration_bounds = array<i64: 1, 1, 1>, scalar_prefetch = 0 : i64, scratch_operands = 1 : i64, tpu.core_type = #tpu.core_type<tc>, window_params = [{transform_indices = @transform_0, window_bounds = array<i64: 512, 128>}, {transform_indices = @transform_1, window_bounds = array<i64: 128, 128>}, {transform_indices = @transform_2, window_bounds = array<i64: 1, 128>}, {transform_indices = @transform_3, window_bounds = array<i64: 512, 128>}]} {
    %c0_i32 = arith.constant 0 : i32
    %0 = arith.cmpi eq, %arg2, %c0_i32 : i32
    %1 = arith.extui %0 : i1 to i32
    %c0_i32_0 = arith.constant 0 : i32
    %2 = arith.cmpi ne, %1, %c0_i32_0 : i32
    scf.if %2 {
      %cst_10 = arith.constant 0.000000e+00 : f32
      %12 = vector.broadcast %cst_10 : f32 to vector<512x128xf32>
      %c0_11 = arith.constant 0 : index
      %c0_12 = arith.constant 0 : index
      %13 = vector.load %arg7[%c0_11, %c0_12] : memref<512x128xf32, #tpu.memory_space<vmem>>, vector<512x128xf32>
      tpu.vector_store %arg7[%c0_11, %c0_12], %12 {strides = array<i32>} : memref<512x128xf32, #tpu.memory_space<vmem>>, vector<512x128xf32>,
    } else {
    }
    %c0 = arith.constant 0 : index
    %c0_1 = arith.constant 0 : index
    %3 = vector.load %arg7[%c0, %c0_1] : memref<512x128xf32, #tpu.memory_space<vmem>>, vector<512x128xf32>
    %c0_2 = arith.constant 0 : index
    %c0_3 = arith.constant 0 : index
    %4 = vector.load %arg3[%c0_2, %c0_3] : memref<512x128xbf16, #tpu.memory_space<vmem>>, vector<512x128xbf16>
    %c0_4 = arith.constant 0 : index
    %c0_5 = arith.constant 0 : index
    %5 = vector.load %arg4[%c0_4, %c0_5] : memref<128x128xbf16, #tpu.memory_space<vmem>>, vector<128x128xbf16>
    %cst = arith.constant dense<0.000000e+00> : vector<512x128xf32>
    %6 = tpu.matmul %4, %5, %cst {dimension_numbers = #tpu.dot_dimension_numbers<[1], [0], [0], [1], [0, 0, 1, 1], [], []>} : vector<512x128xbf16>, vector<128x128xbf16>, vector<512x128xf32> -> vector<512x128xf32>
    %7 = arith.addf %3, %6 : vector<512x128xf32>
    %c0_6 = arith.constant 0 : index
    %c0_7 = arith.constant 0 : index
    %8 = vector.load %arg7[%c0_6, %c0_7] : memref<512x128xf32, #tpu.memory_space<vmem>>, vector<512x128xf32>
    tpu.vector_store %arg7[%c0_6, %c0_7], %7 {strides = array<i32>} : memref<512x128xf32, #tpu.memory_space<vmem>>, vector<512x128xf32>,
    %c0_i32_8 = arith.constant 0 : i32
    %9 = arith.cmpi eq, %arg2, %c0_i32_8 : i32
    %10 = arith.extui %9 : i1 to i32
    %c0_i32_9 = arith.constant 0 : i32
    %11 = arith.cmpi ne, %10, %c0_i32_9 : i32
    scf.if %11 {
      %c0_10 = arith.constant 0 : index
      %c0_11 = arith.constant 0 : index
      %12 = vector.load %arg7[%c0_10, %c0_11] : memref<512x128xf32, #tpu.memory_space<vmem>>, vector<512x128xf32>
      %c0_12 = arith.constant 0 : index
      %c0_13 = arith.constant 0 : index
      %13 = vector.load %arg5[%c0_12, %c0_13] : memref<1x128xf32, #tpu.memory_space<vmem>>, vector<1x128xf32>
      %14 = vector.broadcast %13 : vector<1x128xf32> to vector<512x128xf32>
      %15 = arith.addf %12, %14 : vector<512x128xf32>
      %c0_14 = arith.constant 0 : index
      %c0_15 = arith.constant 0 : index
      %16 = vector.load %arg6[%c0_14, %c0_15] : memref<512x128xf32, #tpu.memory_space<vmem>>, vector<512x128xf32>
      tpu.vector_store %arg6[%c0_14, %c0_15], %15 {strides = array<i32>} : memref<512x128xf32, #tpu.memory_space<vmem>>, vector<512x128xf32>,
    } else {
    }
    return
  }
  func.func @transform_0(%arg0: i32, %arg1: i32, %arg2: i32) -> (i32, i32) {
    %c0_i32 = arith.constant 0 : i32
    return %arg0, %arg2 : i32, i32
  }
  func.func @transform_1(%arg0: i32, %arg1: i32, %arg2: i32) -> (i32, i32) {
    %c0_i32 = arith.constant 0 : i32
    return %arg2, %arg1 : i32, i32
  }
  func.func @transform_2(%arg0: i32, %arg1: i32, %arg2: i32) -> (i32, i32) {
    %c0_i32 = arith.constant 0 : i32
    %c0_i32_0 = arith.constant 0 : i32
    return %c0_i32, %arg1 : i32, i32
  }
  func.func @transform_3(%arg0: i32, %arg1: i32, %arg2: i32) -> (i32, i32) {
    %c0_i32 = arith.constant 0 : i32
    return %arg0, %arg1 : i32, i32
  }
}

</mosaic_0001>

<llo_original>
// kernel: tpu_custom_call.1
$region0: #{tpu_custom_call.1}
  #allocation0 [shape = 'u32[]', space=smem, size = 0x4, offset = 0x4, fixed_abs, tag = 'smem constant byte address 0x4 - core index']
  #allocation1 [shape = 'u32[144,128]{1,0:T(1,128)}', space=vmem, size = 0x12000, scoped, tag = 'internal scratch']
  #allocation2 [shape = 'f32[512,128]{1,0:T(8,128)}', space=vmem, size = 0x40000, scoped, tag = 'scratch operand']
  %s0 = inlined_call_operand.hbm [shape: bf16[512,128], index: 0, kind: input, shape index: {}]
  %s1 = inlined_call_operand.hbm [shape: bf16[128,128], index: 1, kind: input, shape index: {}]
  %s2 = inlined_call_operand.vmem [shape: f32[1,128], index: 2, kind: input, shape index: {}]
  %s3 = inlined_call_operand.hbm [shape: f32[512,128], index: 3, kind: output, shape index: {}]
  %s4 = sld [smem:[#allocation0]]
  $region38: #{tpu_custom_call.1} parent=0
    _
  %s6 = ssub.s32 1, %s4
  %s7 = scalar_select 0, %s6, %s4
  $region1: #{tpu_custom_call.1} parent=0
    #allocation3 [shape = 'u8[131072]{0}', space=vmem, size = 0x20000, scoped, tag = 'input window, operand 0, single buffered']
    #allocation4 [shape = 's32[1]{0}', space=sflag, size = 0x4, scoped, tag = 'scoped memory for tpu_custom_call.1']
    #allocation5 [shape = 's32[1]{0}', space=sflag, size = 0x4, scoped, tag = 'scoped memory for tpu_custom_call.1']
    #allocation6 [shape = 'u8[32768]{0}', space=vmem, size = 0x8000, scoped, tag = 'input window, operand 1, single buffered']
    #allocation7 [shape = 's32[1]{0}', space=sflag, size = 0x4, scoped, tag = 'scoped memory for tpu_custom_call.1']
    #allocation8 [shape = 'u8[262144]{0}', space=vmem, size = 0x40000, scoped, tag = 'output window, operand 0, single buffered']
    %8 = vsyncpa [#allocation4], 0
    %9 = vsyncpa [#allocation7], 0
    %10 = vsyncpa [#allocation5], 0
    // Predicated region
    $region2: #{tpu_custom_call.1} parent=1 // pred_check
      _
    $region3: #{tpu_custom_call.1} parent=1 // pred_check_branch
      %12 = sbr.rel (0) target = $region5
    $region4: #{tpu_custom_call.1} parent=1 // pred_region
      %s14 = ssub.s32 4096, 4096
      %15 = vsyncadd [#allocation4], %s14
      %s16 = sshll.u32 [#allocation3], 4
      %s17 = int_to_ptr.vmem [resolvable:$true] %s16
      %22 = dma.hbm_to_vmem [thread:$0]  %s0, 4096, %s17, [#allocation4], 64, 64, 4
    $region5: #{tpu_custom_call.1} parent=1 // pred_fallthru
      _
    // Predicated region
    $region6: #{tpu_custom_call.1} parent=1 // pred_check
      _
    $region7: #{tpu_custom_call.1} parent=1 // pred_check_branch
      %24 = sbr.rel (0) target = $region9
    $region8: #{tpu_custom_call.1} parent=1 // pred_region
      %s26 = ssub.s32 1024, 1024
      %27 = vsyncadd [#allocation7], %s26
      %s28 = sshll.u32 [#allocation6], 4
      %s29 = int_to_ptr.vmem [resolvable:$true] %s28
      %34 = dma.hbm_to_vmem [thread:$0]  %s1, 1024, %s29, [#allocation7], 64, 64, 4
    $region9: #{tpu_custom_call.1} parent=1 // pred_fallthru
      _
    // Predicated region
    $region10: #{tpu_custom_call.1} parent=1 // pred_check
      _
    $region11: #{tpu_custom_call.1} parent=1 // pred_check_branch
      %36 = sbr.rel (0) target = $region13
    $region12: #{tpu_custom_call.1} parent=1 // pred_region
      _
    $region13: #{tpu_custom_call.1} parent=1 // pred_fallthru
      _
    // Predicated region
    $region14: #{tpu_custom_call.1} parent=1 // pred_check
      _
    $region15: #{tpu_custom_call.1} parent=1 // pred_check_branch
      %38 = sbr.rel (0) target = $region17
    $region16: #{tpu_custom_call.1} parent=1 // pred_region
      %39 = dma.done [#allocation4], 4096
    $region17: #{tpu_custom_call.1} parent=1 // pred_fallthru
      _
    // Predicated region
    $region18: #{tpu_custom_call.1} parent=1 // pred_check
      _
    $region19: #{tpu_custom_call.1} parent=1 // pred_check_branch
      %41 = sbr.rel (0) target = $region21
    $region20: #{tpu_custom_call.1} parent=1 // pred_region
      %42 = dma.done [#allocation7], 1024
    $region21: #{tpu_custom_call.1} parent=1 // pred_fallthru
      _
    %p44 = scmp.eq.s32.totalorder 0, 0
    // Predicated region
    $region22: #{tpu_custom_call.1} parent=1 // pred_check
      %p45 = pneg %p44
    $region23: #{tpu_custom_call.1} parent=1 // pred_check_branch
      %47 = sbr.rel (%p45) target = $region25
    $region24: #{tpu_custom_call.1} parent=1 // pred_region
      %48 = vst [vmem:[#allocation2] sm:$0xff] 0.0
      %49 = vst [vmem:[#allocation2 + $0x8] sm:$0xff] 0.0
      %50 = vst [vmem:[#allocation2 + $0x10] sm:$0xff] 0.0
      %51 = vst [vmem:[#allocation2 + $0x18] sm:$0xff] 0.0
      %52 = vst [vmem:[#allocation2 + $0x20] sm:$0xff] 0.0
      %53 = vst [vmem:[#allocation2 + $0x28] sm:$0xff] 0.0
      %54 = vst [vmem:[#allocation2 + $0x30] sm:$0xff] 0.0
      %55 = vst [vmem:[#allocation2 + $0x38] sm:$0xff] 0.0
      %56 = vst [vmem:[#allocation2 + $0x40] sm:$0xff] 0.0
      %57 = vst [vmem:[#allocation2 + $0x48] sm:$0xff] 0.0
      %58 = vst [vmem:[#allocation2 + $0x50] sm:$0xff] 0.0
      %59 = vst [vmem:[#allocation2 + $0x58] sm:$0xff] 0.0
      %60 = vst [vmem:[#allocation2 + $0x60] sm:$0xff] 0.0
      %61 = vst [vmem:[#allocation2 + $0x68] sm:$0xff] 0.0
      %62 = vst [vmem:[#allocation2 + $0x70] sm:$0xff] 0.0
      %63 = vst [vmem:[#allocation2 + $0x78] sm:$0xff] 0.0
      %64 = vst [vmem:[#allocation2 + $0x80] sm:$0xff] 0.0
      %65 = vst [vmem:[#allocation2 + $0x88] sm:$0xff] 0.0
      %66 = vst [vmem:[#allocation2 + $0x90] sm:$0xff] 0.0
      %67 = vst [vmem:[#allocation2 + $0x98] sm:$0xff] 0.0
      %68 = vst [vmem:[#allocation2 + $0xa0] sm:$0xff] 0.0
      %69 = vst [vmem:[#allocation2 + $0xa8] sm:$0xff] 0.0
      %70 = vst [vmem:[#allocation2 + $0xb0] sm:$0xff] 0.0
      %71 = vst [vmem:[#allocation2 + $0xb8] sm:$0xff] 0.0
      %72 = vst [vmem:[#allocation2 + $0xc0] sm:$0xff] 0.0
      %73 = vst [vmem:[#allocation2 + $0xc8] sm:$0xff] 0.0
      %74 = vst [vmem:[#allocation2 + $0xd0] sm:$0xff] 0.0
      %75 = vst [vmem:[#allocation2 + $0xd8] sm:$0xff] 0.0
      %76 = vst [vmem:[#allocation2 + $0xe0] sm:$0xff] 0.0
      %77 = vst [vmem:[#allocation2 + $0xe8] sm:$0xff] 0.0
      %78 = vst [vmem:[#allocation2 + $0xf0] sm:$0xff] 0.0
      %79 = vst [vmem:[#allocation2 + $0xf8] sm:$0xff] 0.0
      %80 = vst [vmem:[#allocation2 + $0x100] sm:$0xff] 0.0
      %81 = vst [vmem:[#allocation2 + $0x108] sm:$0xff] 0.0
      %82 = vst [vmem:[#allocation2 + $0x110] sm:$0xff] 0.0
      %83 = vst [vmem:[#allocation2 + $0x118] sm:$0xff] 0.0
      %84 = vst [vmem:[#allocation2 + $0x120] sm:$0xff] 0.0
      %85 = vst [vmem:[#allocation2 + $0x128] sm:$0xff] 0.0
      %86 = vst [vmem:[#allocation2 + $0x130] sm:$0xff] 0.0
      %87 = vst [vmem:[#allocation2 + $0x138] sm:$0xff] 0.0
      %88 = vst [vmem:[#allocation2 + $0x140] sm:$0xff] 0.0
      %89 = vst [vmem:[#allocation2 + $0x148] sm:$0xff] 0.0
      %90 = vst [vmem:[#allocation2 + $0x150] sm:$0xff] 0.0
      %91 = vst [vmem:[#allocation2 + $0x158] sm:$0xff] 0.0
      %92 = vst [vmem:[#allocation2 + $0x160] sm:$0xff] 0.0
      %93 = vst [vmem:[#allocation2 + $0x168] sm:$0xff] 0.0
      %94 = vst [vmem:[#allocation2 + $0x170] sm:$0xff] 0.0
      %95 = vst [vmem:[#allocation2 + $0x178] sm:$0xff] 0.0
      %96 = vst [vmem:[#allocation2 + $0x180] sm:$0xff] 0.0
      %97 = vst [vmem:[#allocation2 + $0x188] sm:$0xff] 0.0
      %98 = vst [vmem:[#allocation2 + $0x190] sm:$0xff] 0.0
      %99 = vst [vmem:[#allocation2 + $0x198] sm:$0xff] 0.0
      %100 = vst [vmem:[#allocation2 + $0x1a0] sm:$0xff] 0.0
      %101 = vst [vmem:[#allocation2 + $0x1a8] sm:$0xff] 0.0
      %102 = vst [vmem:[#allocation2 + $0x1b0] sm:$0xff] 0.0
      %103 = vst [vmem:[#allocation2 + $0x1b8] sm:$0xff] 0.0
      %104 = vst [vmem:[#allocation2 + $0x1c0] sm:$0xff] 0.0
      %105 = vst [vmem:[#allocation2 + $0x1c8] sm:$0xff] 0.0
      %106 = vst [vmem:[#allocation2 + $0x1d0] sm:$0xff] 0.0
      %107 = vst [vmem:[#allocation2 + $0x1d8] sm:$0xff] 0.0
      %108 = vst [vmem:[#allocation2 + $0x1e0] sm:$0xff] 0.0
      %109 = vst [vmem:[#allocation2 + $0x1e8] sm:$0xff] 0.0
      %110 = vst [vmem:[#allocation2 + $0x1f0] sm:$0xff] 0.0
      %111 = vst [vmem:[#allocation2 + $0x1f8] sm:$0xff] 0.0
    $region25: #{tpu_custom_call.1} parent=1 // pred_fallthru
      _
    %v112 = vld [vmem:[#allocation2] sm:$0xff]
    %v113 = vld [vmem:[#allocation2 + $0x8] sm:$0xff]
    %v114 = vld [vmem:[#allocation2 + $0x10] sm:$0xff]
    %v115 = vld [vmem:[#allocation2 + $0x18] sm:$0xff]
    %v116 = vld [vmem:[#allocation2 + $0x20] sm:$0xff]
    %v117 = vld [vmem:[#allocation2 + $0x28] sm:$0xff]
    %v118 = vld [vmem:[#allocation2 + $0x30] sm:$0xff]
    %v119 = vld [vmem:[#allocation2 + $0x38] sm:$0xff]
    %v120 = vld [vmem:[#allocation2 + $0x40] sm:$0xff]
    %v121 = vld [vmem:[#allocation2 + $0x48] sm:$0xff]
    %v122 = vld [vmem:[#allocation2 + $0x50] sm:$0xff]
    %v123 = vld [vmem:[#allocation2 + $0x58] sm:$0xff]
    %v124 = vld [vmem:[#allocation2 + $0x60] sm:$0xff]
    %v125 = vld [vmem:[#allocation2 + $0x68] sm:$0xff]
    %v126 = vld [vmem:[#allocation2 + $0x70] sm:$0xff]
    %v127 = vld [vmem:[#allocation2 + $0x78] sm:$0xff]
    %v128 = vld [vmem:[#allocation2 + $0x80] sm:$0xff]
    %v129 = vld [vmem:[#allocation2 + $0x88] sm:$0xff]
    %v130 = vld [vmem:[#allocation2 + $0x90] sm:$0xff]
    %v131 = vld [vmem:[#allocation2 + $0x98] sm:$0xff]
    %v132 = vld [vmem:[#allocation2 + $0xa0] sm:$0xff]
    %v133 = vld [vmem:[#allocation2 + $0xa8] sm:$0xff]
    %v134 = vld [vmem:[#allocation2 + $0xb0] sm:$0xff]
    %v135 = vld [vmem:[#allocation2 + $0xb8] sm:$0xff]
    %v136 = vld [vmem:[#allocation2 + $0xc0] sm:$0xff]
    %v137 = vld [vmem:[#allocation2 + $0xc8] sm:$0xff]
    %v138 = vld [vmem:[#allocation2 + $0xd0] sm:$0xff]
    %v139 = vld [vmem:[#allocation2 + $0xd8] sm:$0xff]
    %v140 = vld [vmem:[#allocation2 + $0xe0] sm:$0xff]
    %v141 = vld [vmem:[#allocation2 + $0xe8] sm:$0xff]
    %v142 = vld [vmem:[#allocation2 + $0xf0] sm:$0xff]
    %v143 = vld [vmem:[#allocation2 + $0xf8] sm:$0xff]
    %v144 = vld [vmem:[#allocation2 + $0x100] sm:$0xff]
    %v145 = vld [vmem:[#allocation2 + $0x108] sm:$0xff]
    %v146 = vld [vmem:[#allocation2 + $0x110] sm:$0xff]
    %v147 = vld [vmem:[#allocation2 + $0x118] sm:$0xff]
    %v148 = vld [vmem:[#allocation2 + $0x120] sm:$0xff]
    %v149 = vld [vmem:[#allocation2 + $0x128] sm:$0xff]
    %v150 = vld [vmem:[#allocation2 + $0x130] sm:$0xff]
    %v151 = vld [vmem:[#allocation2 + $0x138] sm:$0xff]
    %v152 = vld [vmem:[#allocation2 + $0x140] sm:$0xff]
    %v153 = vld [vmem:[#allocation2 + $0x148] sm:$0xff]
    %v154 = vld [vmem:[#allocation2 + $0x150] sm:$0xff]
    %v155 = vld [vmem:[#allocation2 + $0x158] sm:$0xff]
    %v156 = vld [vmem:[#allocation2 + $0x160] sm:$0xff]
    %v157 = vld [vmem:[#allocation2 + $0x168] sm:$0xff]
    %v158 = vld [vmem:[#allocation2 + $0x170] sm:$0xff]
    %v159 = vld [vmem:[#allocation2 + $0x178] sm:$0xff]
    %v160 = vld [vmem:[#allocation2 + $0x180] sm:$0xff]
    %v161 = vld [vmem:[#allocation2 + $0x188] sm:$0xff]
    %v162 = vld [vmem:[#allocation2 + $0x190] sm:$0xff]
    %v163 = vld [vmem:[#allocation2 + $0x198] sm:$0xff]
    %v164 = vld [vmem:[#allocation2 + $0x1a0] sm:$0xff]
    %v165 = vld [vmem:[#allocation2 + $0x1a8] sm:$0xff]
    %v166 = vld [vmem:[#allocation2 + $0x1b0] sm:$0xff]
    %v167 = vld [vmem:[#allocation2 + $0x1b8] sm:$0xff]
    %v168 = vld [vmem:[#allocation2 + $0x1c0] sm:$0xff]
    %v169 = vld [vmem:[#allocation2 + $0x1c8] sm:$0xff]
    %v170 = vld [vmem:[#allocation2 + $0x1d0] sm:$0xff]
    %v171 = vld [vmem:[#allocation2 + $0x1d8] sm:$0xff]
    %v172 = vld [vmem:[#allocation2 + $0x1e0] sm:$0xff]
    %v173 = vld [vmem:[#allocation2 + $0x1e8] sm:$0xff]
    %v174 = vld [vmem:[#allocation2 + $0x1f0] sm:$0xff]
    %v175 = vld [vmem:[#allocation2 + $0x1f8] sm:$0xff]
    %v176 = vld [vmem:[#allocation3] sm:$0xf]
    %v177 = vld [vmem:[#allocation3 + $0x4] sm:$0xf]
    %v178 = vld [vmem:[#allocation3 + $0x8] sm:$0xf]
    %v179 = vld [vmem:[#allocation3 + $0xc] sm:$0xf]
    %v180 = vld [vmem:[#allocation3 + $0x10] sm:$0xf]
    %v181 = vld [vmem:[#allocation3 + $0x14] sm:$0xf]
    %v182 = vld [vmem:[#allocation3 + $0x18] sm:$0xf]
    %v183 = vld [vmem:[#allocation3 + $0x1c] sm:$0xf]
    %v184 = vld [vmem:[#allocation3 + $0x20] sm:$0xf]
    %v185 = vld [vmem:[#allocation3 + $0x24] sm:$0xf]
    %v186 = vld [vmem:[#allocation3 + $0x28] sm:$0xf]
    %v187 = vld [vmem:[#allocation3 + $0x2c] sm:$0xf]
    %v188 = vld [vmem:[#allocation3 + $0x30] sm:$0xf]
    %v189 = vld [vmem:[#allocation3 + $0x34] sm:$0xf]
    %v190 = vld [vmem:[#allocation3 + $0x38] sm:$0xf]
    %v191 = vld [vmem:[#allocation3 + $0x3c] sm:$0xf]
    %v192 = vld [vmem:[#allocation3 + $0x40] sm:$0xf]
    %v193 = vld [vmem:[#allocation3 + $0x44] sm:$0xf]
    %v194 = vld [vmem:[#allocation3 + $0x48] sm:$0xf]
    %v195 = vld [vmem:[#allocation3 + $0x4c] sm:$0xf]
    %v196 = vld [vmem:[#allocation3 + $0x50] sm:$0xf]
    %v197 = vld [vmem:[#allocation3 + $0x54] sm:$0xf]
    %v198 = vld [vmem:[#allocation3 + $0x58] sm:$0xf]
    %v199 = vld [vmem:[#allocation3 + $0x5c] sm:$0xf]
    %v200 = vld [vmem:[#allocation3 + $0x60] sm:$0xf]
    %v201 = vld [vmem:[#allocation3 + $0x64] sm:$0xf]
    %v202 = vld [vmem:[#allocation3 + $0x68] sm:$0xf]
    %v203 = vld [vmem:[#allocation3 + $0x6c] sm:$0xf]
    %v204 = vld [vmem:[#allocation3 + $0x70] sm:$0xf]
    %v205 = vld [vmem:[#allocation3 + $0x74] sm:$0xf]
    %v206 = vld [vmem:[#allocation3 + $0x78] sm:$0xf]
    %v207 = vld [vmem:[#allocation3 + $0x7c] sm:$0xf]
    %v208 = vld [vmem:[#allocation3 + $0x80] sm:$0xf]
    %v209 = vld [vmem:[#allocation3 + $0x84] sm:$0xf]
    %v210 = vld [vmem:[#allocation3 + $0x88] sm:$0xf]
    %v211 = vld [vmem:[#allocation3 + $0x8c] sm:$0xf]
    %v212 = vld [vmem:[#allocation3 + $0x90] sm:$0xf]
    %v213 = vld [vmem:[#allocation3 + $0x94] sm:$0xf]
    %v214 = vld [vmem:[#allocation3 + $0x98] sm:$0xf]
    %v215 = vld [vmem:[#allocation3 + $0x9c] sm:$0xf]
    %v216 = vld [vmem:[#allocation3 + $0xa0] sm:$0xf]
    %v217 = vld [vmem:[#allocation3 + $0xa4] sm:$0xf]
    %v218 = vld [vmem:[#allocation3 + $0xa8] sm:$0xf]
    %v219 = vld [vmem:[#allocation3 + $0xac] sm:$0xf]
    %v220 = vld [vmem:[#allocation3 + $0xb0] sm:$0xf]
    %v221 = vld [vmem:[#allocation3 + $0xb4] sm:$0xf]
    %v222 = vld [vmem:[#allocation3 + $0xb8] sm:$0xf]
    %v223 = vld [vmem:[#allocation3 + $0xbc] sm:$0xf]
    %v224 = vld [vmem:[#allocation3 + $0xc0] sm:$0xf]
    %v225 = vld [vmem:[#allocation3 + $0xc4] sm:$0xf]
    %v226 = vld [vmem:[#allocation3 + $0xc8] sm:$0xf]
    %v227 = vld [vmem:[#allocation3 + $0xcc] sm:$0xf]
    %v228 = vld [vmem:[#allocation3 + $0xd0] sm:$0xf]
    %v229 = vld [vmem:[#allocation3 + $0xd4] sm:$0xf]
    %v230 = vld [vmem:[#allocation3 + $0xd8] sm:$0xf]
    %v231 = vld [vmem:[#allocation3 + $0xdc] sm:$0xf]
    %v232 = vld [vmem:[#allocation3 + $0xe0] sm:$0xf]
    %v233 = vld [vmem:[#allocation3 + $0xe4] sm:$0xf]
    %v234 = vld [vmem:[#allocation3 + $0xe8] sm:$0xf]
    %v235 = vld [vmem:[#allocation3 + $0xec] sm:$0xf]
    %v236 = vld [vmem:[#allocation3 + $0xf0] sm:$0xf]
    %v237 = vld [vmem:[#allocation3 + $0xf4] sm:$0xf]
    %v238 = vld [vmem:[#allocation3 + $0xf8] sm:$0xf]
    %v239 = vld [vmem:[#allocation3 + $0xfc] sm:$0xf]
    %v240 = vld [vmem:[#allocation6] sm:$0xf]
    %v241 = vld [vmem:[#allocation6 + $0x4] sm:$0xf]
    %v242 = vld [vmem:[#allocation6 + $0x8] sm:$0xf]
    %v243 = vld [vmem:[#allocation6 + $0xc] sm:$0xf]
    %v244 = vld [vmem:[#allocation6 + $0x10] sm:$0xf]
    %v245 = vld [vmem:[#allocation6 + $0x14] sm:$0xf]
    %v246 = vld [vmem:[#allocation6 + $0x18] sm:$0xf]
    %v247 = vld [vmem:[#allocation6 + $0x1c] sm:$0xf]
    %v248 = vld [vmem:[#allocation6 + $0x20] sm:$0xf]
    %v249 = vld [vmem:[#allocation6 + $0x24] sm:$0xf]
    %v250 = vld [vmem:[#allocation6 + $0x28] sm:$0xf]
    %v251 = vld [vmem:[#allocation6 + $0x2c] sm:$0xf]
    %v252 = vld [vmem:[#allocation6 + $0x30] sm:$0xf]
    %v253 = vld [vmem:[#allocation6 + $0x34] sm:$0xf]
    %v254 = vld [vmem:[#allocation6 + $0x38] sm:$0xf]
    %v255 = vld [vmem:[#allocation6 + $0x3c] sm:$0xf]
    %v320 = vunpack.c.l.b16 %v176
    %v321 = vunpack.c.l.b16 %v177
    %v322 = vunpack.c.l.b16 %v178
    %v323 = vunpack.c.l.b16 %v179
    %v324 = vunpack.c.l.b16 %v180
    %v325 = vunpack.c.l.b16 %v181
    %v326 = vunpack.c.l.b16 %v182
    %v327 = vunpack.c.l.b16 %v183
    %v328 = vunpack.c.l.b16 %v184
    %v329 = vunpack.c.l.b16 %v185
    %v330 = vunpack.c.l.b16 %v186
    %v331 = vunpack.c.l.b16 %v187
    %v332 = vunpack.c.l.b16 %v188
    %v333 = vunpack.c.l.b16 %v189
    %v334 = vunpack.c.l.b16 %v190
    %v335 = vunpack.c.l.b16 %v191
    %v336 = vunpack.c.l.b16 %v192
    %v337 = vunpack.c.l.b16 %v193
    %v338 = vunpack.c.l.b16 %v194
    %v339 = vunpack.c.l.b16 %v195
    %v340 = vunpack.c.l.b16 %v196
    %v341 = vunpack.c.l.b16 %v197
    %v342 = vunpack.c.l.b16 %v198
    %v343 = vunpack.c.l.b16 %v199
    %v344 = vunpack.c.l.b16 %v200
    %v345 = vunpack.c.l.b16 %v201
    %v346 = vunpack.c.l.b16 %v202
    %v347 = vunpack.c.l.b16 %v203
    %v348 = vunpack.c.l.b16 %v204
    %v349 = vunpack.c.l.b16 %v205
    %v350 = vunpack.c.l.b16 %v206
    %v351 = vunpack.c.l.b16 %v207
    %v352 = vunpack.c.l.b16 %v208
    %v353 = vunpack.c.l.b16 %v209
    %v354 = vunpack.c.l.b16 %v210
    %v355 = vunpack.c.l.b16 %v211
    %v356 = vunpack.c.l.b16 %v212
    %v357 = vunpack.c.l.b16 %v213
    %v358 = vunpack.c.l.b16 %v214
    %v359 = vunpack.c.l.b16 %v215
    %v360 = vunpack.c.l.b16 %v216
    %v361 = vunpack.c.l.b16 %v217
    %v362 = vunpack.c.l.b16 %v218
    %v363 = vunpack.c.l.b16 %v219
    %v364 = vunpack.c.l.b16 %v220
    %v365 = vunpack.c.l.b16 %v221
    %v366 = vunpack.c.l.b16 %v222
    %v367 = vunpack.c.l.b16 %v223
    %v368 = vunpack.c.l.b16 %v224
    %v369 = vunpack.c.l.b16 %v225
    %v370 = vunpack.c.l.b16 %v226
    %v371 = vunpack.c.l.b16 %v227
    %v372 = vunpack.c.l.b16 %v228
    %v373 = vunpack.c.l.b16 %v229
    %v374 = vunpack.c.l.b16 %v230
    %v375 = vunpack.c.l.b16 %v231
    %v376 = vunpack.c.l.b16 %v232
    %v377 = vunpack.c.l.b16 %v233
    %v378 = vunpack.c.l.b16 %v234
    %v379 = vunpack.c.l.b16 %v235
    %v380 = vunpack.c.l.b16 %v236
    %v381 = vunpack.c.l.b16 %v237
    %v382 = vunpack.c.l.b16 %v238
    %v383 = vunpack.c.l.b16 %v239
    %v384 = vpack.c.b16 %v321, %v320
    %v385 = vpack.c.b16 %v323, %v322
    %v386 = vpack.c.b16 %v325, %v324
    %v387 = vpack.c.b16 %v327, %v326
    %v388 = vpack.c.b16 %v329, %v328
    %v389 = vpack.c.b16 %v331, %v330
    %v390 = vpack.c.b16 %v333, %v332
    %v391 = vpack.c.b16 %v335, %v334
    %v392 = vpack.c.b16 %v337, %v336
    %v393 = vpack.c.b16 %v339, %v338
    %v394 = vpack.c.b16 %v341, %v340
    %v395 = vpack.c.b16 %v343, %v342
    %v396 = vpack.c.b16 %v345, %v344
    %v397 = vpack.c.b16 %v347, %v346
    %v398 = vpack.c.b16 %v349, %v348
    %v399 = vpack.c.b16 %v351, %v350
    %v400 = vpack.c.b16 %v353, %v352
    %v401 = vpack.c.b16 %v355, %v354
    %v402 = vpack.c.b16 %v357, %v356
    %v403 = vpack.c.b16 %v359, %v358
    %v404 = vpack.c.b16 %v361, %v360
    %v405 = vpack.c.b16 %v363, %v362
    %v406 = vpack.c.b16 %v365, %v364
    %v407 = vpack.c.b16 %v367, %v366
    %v408 = vpack.c.b16 %v369, %v368
    %v409 = vpack.c.b16 %v371, %v370
    %v410 = vpack.c.b16 %v373, %v372
    %v411 = vpack.c.b16 %v375, %v374
    %v412 = vpack.c.b16 %v377, %v376
    %v413 = vpack.c.b16 %v379, %v378
    %v414 = vpack.c.b16 %v381, %v380
    %v415 = vpack.c.b16 %v383, %v382
    %v464 = vunpack.c.l.b16 %v240
    %v465 = vunpack.c.l.b16 %v241
    %v466 = vunpack.c.l.b16 %v242
    %v467 = vunpack.c.l.b16 %v243
    %v468 = vunpack.c.l.b16 %v244
    %v469 = vunpack.c.l.b16 %v245
    %v470 = vunpack.c.l.b16 %v246
    %v471 = vunpack.c.l.b16 %v247
    %v472 = vunpack.c.l.b16 %v248
    %v473 = vunpack.c.l.b16 %v249
    %v474 = vunpack.c.l.b16 %v250
    %v475 = vunpack.c.l.b16 %v251
    %v476 = vunpack.c.l.b16 %v252
    %v477 = vunpack.c.l.b16 %v253
    %v478 = vunpack.c.l.b16 %v254
    %v479 = vunpack.c.l.b16 %v255
    %v480 = vpack.c.b16 %v465, %v464
    %v481 = vpack.c.b16 %v467, %v466
    %v482 = vpack.c.b16 %v469, %v468
    %v483 = vpack.c.b16 %v471, %v470
    %v484 = vpack.c.b16 %v473, %v472
    %v485 = vpack.c.b16 %v475, %v474
    %v486 = vpack.c.b16 %v477, %v476
    %v487 = vpack.c.b16 %v479, %v478
    %496 = vmatprep.subr.bf16.mxu0 0
    %497 = vmatpush1.bf16.msra.mxu0 %v480
    %498 = vmatprep.subr.bf16.mxu0 0
    %499 = vmatpush1.bf16.msra.mxu0 %v481
    %500 = vmatprep.subr.bf16.mxu0 0
    %501 = vmatpush1.bf16.msra.mxu0 %v482
    %502 = vmatprep.subr.bf16.mxu0 0
    %503 = vmatpush1.bf16.msra.mxu0 %v483
    %504 = vmatprep.subr.bf16.mxu0 0
    %505 = vmatpush1.bf16.msra.mxu0 %v484
    %506 = vmatprep.subr.bf16.mxu0 0
    %507 = vmatpush1.bf16.msra.mxu0 %v485
    %508 = vmatprep.subr.bf16.mxu0 0
    %509 = vmatpush1.bf16.msra.mxu0 %v486
    %510 = vmatprep.subr.bf16.mxu0 0
    %511 = vmatpush1.bf16.msra.mxu0 %v487
    %512 = vmatprep.subr.bf16.mxu0 0
    %513 = vmatpush1.bf16.msra.mxu0 0
    %514 = vmatprep.subr.bf16.mxu0 0
    %515 = vmatpush1.bf16.msra.mxu0 0
    %516 = vmatprep.subr.bf16.mxu0 0
    %517 = vmatpush1.bf16.msra.mxu0 0
    %518 = vmatprep.subr.bf16.mxu0 0
    %519 = vmatpush1.bf16.msra.mxu0 0
    %520 = vmatprep.subr.bf16.mxu0 0
    %521 = vmatpush1.bf16.msra.mxu0 0
    %522 = vmatprep.subr.bf16.mxu0 0
    %523 = vmatpush1.bf16.msra.mxu0 0
    %524 = vmatprep.subr.bf16.mxu0 0
    %525 = vmatpush1.bf16.msra.mxu0 0
    %526 = vmatprep.subr.bf16.mxu0 0
    %527 = vmatpush1.bf16.msra.mxu0 0
    %528 = vmatprep.mubr.bf16.mxu0 0
    %529 = vmatmul.mubr.bf16.gmra.mrb[0].mxu0 %v384
    %v530 = vpop.f32.mrb[0].mxu0
    %v531 = vadd.f32 0.0, %v530
    %v532 = vpop.f32.mrb[0].mxu0
    %v533 = vpop.f32.mrb[0].mxu0
    %v534 = vadd.f32 0.0, %v533
    %v535 = vpop.f32.mrb[0].mxu0
    %536 = vmatprep.mubr.bf16.mxu0 0
    %537 = vmatmul.mubr.bf16.gmra.mrb[0].mxu0 %v385
    %v538 = vpop.f32.mrb[0].mxu0
    %v539 = vadd.f32 0.0, %v538
    %v540 = vpop.f32.mrb[0].mxu0
    %v541 = vpop.f32.mrb[0].mxu0
    %v542 = vadd.f32 0.0, %v541
    %v543 = vpop.f32.mrb[0].mxu0
    %544 = vmatprep.mubr.bf16.mxu0 0
    %545 = vmatmul.mubr.bf16.gmra.mrb[0].mxu0 %v386
    %v546 = vpop.f32.mrb[0].mxu0
    %v547 = vadd.f32 0.0, %v546
    %v548 = vpop.f32.mrb[0].mxu0
    %v549 = vpop.f32.mrb[0].mxu0
    %v550 = vadd.f32 0.0, %v549
    %v551 = vpop.f32.mrb[0].mxu0
    %552 = vmatprep.mubr.bf16.mxu0 0
    %553 = vmatmul.mubr.bf16.gmra.mrb[0].mxu0 %v387
    %v554 = vpop.f32.mrb[0].mxu0
    %v555 = vadd.f32 0.0, %v554
    %v556 = vpop.f32.mrb[0].mxu0
    %v557 = vpop.f32.mrb[0].mxu0
    %v558 = vadd.f32 0.0, %v557
    %v559 = vpop.f32.mrb[0].mxu0
    %560 = vmatprep.mubr.bf16.mxu0 0
    %561 = vmatmul.mubr.bf16.gmra.mrb[0].mxu0 %v388
    %v562 = vpop.f32.mrb[0].mxu0
    %v563 = vadd.f32 0.0, %v562
    %v564 = vpop.f32.mrb[0].mxu0
    %v565 = vpop.f32.mrb[0].mxu0
    %v566 = vadd.f32 0.0, %v565
    %v567 = vpop.f32.mrb[0].mxu0
    %568 = vmatprep.mubr.bf16.mxu0 0
    %569 = vmatmul.mubr.bf16.gmra.mrb[0].mxu0 %v389
    %v570 = vpop.f32.mrb[0].mxu0
    %v571 = vadd.f32 0.0, %v570
    %v572 = vpop.f32.mrb[0].mxu0
    %v573 = vpop.f32.mrb[0].mxu0
    %v574 = vadd.f32 0.0, %v573
    %v575 = vpop.f32.mrb[0].mxu0
    %576 = vmatprep.mubr.bf16.mxu0 0
    %577 = vmatmul.mubr.bf16.gmra.mrb[0].mxu0 %v390
    %v578 = vpop.f32.mrb[0].mxu0
    %v579 = vadd.f32 0.0, %v578
    %v580 = vpop.f32.mrb[0].mxu0
    %v581 = vpop.f32.mrb[0].mxu0
    %v582 = vadd.f32 0.0, %v581
    %v583 = vpop.f32.mrb[0].mxu0
    %584 = vmatprep.mubr.bf16.mxu0 0
    %585 = vmatmul.mubr.bf16.gmra.mrb[0].mxu0 %v391
    %v586 = vpop.f32.mrb[0].mxu0
    %v587 = vadd.f32 0.0, %v586
    %v588 = vpop.f32.mrb[0].mxu0
    %v589 = vpop.f32.mrb[0].mxu0
    %v590 = vadd.f32 0.0, %v589
    %v591 = vpop.f32.mrb[0].mxu0
    %592 = vmatprep.mubr.bf16.mxu0 0
    %593 = vmatmul.mubr.bf16.gmra.mrb[0].mxu0 %v392
    %v594 = vpop.f32.mrb[0].mxu0
    %v595 = vadd.f32 0.0, %v594
    %v596 = vpop.f32.mrb[0].mxu0
    %v597 = vpop.f32.mrb[0].mxu0
    %v598 = vadd.f32 0.0, %v597
    %v599 = vpop.f32.mrb[0].mxu0
    %600 = vmatprep.mubr.bf16.mxu0 0
    %601 = vmatmul.mubr.bf16.gmra.mrb[0].mxu0 %v393
    %v602 = vpop.f32.mrb[0].mxu0
    %v603 = vadd.f32 0.0, %v602
    %v604 = vpop.f32.mrb[0].mxu0
    %v605 = vpop.f32.mrb[0].mxu0
    %v606 = vadd.f32 0.0, %v605
    %v607 = vpop.f32.mrb[0].mxu0
    %608 = vmatprep.mubr.bf16.mxu0 0
    %609 = vmatmul.mubr.bf16.gmra.mrb[0].mxu0 %v394
    %v610 = vpop.f32.mrb[0].mxu0
    %v611 = vadd.f32 0.0, %v610
    %v612 = vpop.f32.mrb[0].mxu0
    %v613 = vpop.f32.mrb[0].mxu0
    %v614 = vadd.f32 0.0, %v613
    %v615 = vpop.f32.mrb[0].mxu0
    %616 = vmatprep.mubr.bf16.mxu0 0
    %617 = vmatmul.mubr.bf16.gmra.mrb[0].mxu0 %v395
    %v618 = vpop.f32.mrb[0].mxu0
    %v619 = vadd.f32 0.0, %v618
    %v620 = vpop.f32.mrb[0].mxu0
    %v621 = vpop.f32.mrb[0].mxu0
    %v622 = vadd.f32 0.0, %v621
    %v623 = vpop.f32.mrb[0].mxu0
    %624 = vmatprep.mubr.bf16.mxu0 0
    %625 = vmatmul.mubr.bf16.gmra.mrb[0].mxu0 %v396
    %v626 = vpop.f32.mrb[0].mxu0
    %v627 = vadd.f32 0.0, %v626
    %v628 = vpop.f32.mrb[0].mxu0
    %v629 = vpop.f32.mrb[0].mxu0
    %v630 = vadd.f32 0.0, %v629
    %v631 = vpop.f32.mrb[0].mxu0
    %632 = vmatprep.mubr.bf16.mxu0 0
    %633 = vmatmul.mubr.bf16.gmra.mrb[0].mxu0 %v397
    %v634 = vpop.f32.mrb[0].mxu0
    %v635 = vadd.f32 0.0, %v634
    %v636 = vpop.f32.mrb[0].mxu0
    %v637 = vpop.f32.mrb[0].mxu0
    %v638 = vadd.f32 0.0, %v637
    %v639 = vpop.f32.mrb[0].mxu0
    %640 = vmatprep.mubr.bf16.mxu0 0
    %641 = vmatmul.mubr.bf16.gmra.mrb[0].mxu0 %v398
    %v642 = vpop.f32.mrb[0].mxu0
    %v643 = vadd.f32 0.0, %v642
    %v644 = vpop.f32.mrb[0].mxu0
    %v645 = vpop.f32.mrb[0].mxu0
    %v646 = vadd.f32 0.0, %v645
    %v647 = vpop.f32.mrb[0].mxu0
    %648 = vmatprep.mubr.bf16.mxu0 0
    %649 = vmatmul.mubr.bf16.gmra.mrb[0].mxu0 %v399
    %v650 = vpop.f32.mrb[0].mxu0
    %v651 = vadd.f32 0.0, %v650
    %v652 = vpop.f32.mrb[0].mxu0
    %v653 = vpop.f32.mrb[0].mxu0
    %v654 = vadd.f32 0.0, %v653
    %v655 = vpop.f32.mrb[0].mxu0
    %656 = vmatprep.mubr.bf16.mxu0 0
    %657 = vmatmul.mubr.bf16.gmra.mrb[0].mxu0 %v400
    %v658 = vpop.f32.mrb[0].mxu0
    %v659 = vadd.f32 0.0, %v658
    %v660 = vpop.f32.mrb[0].mxu0
    %v661 = vpop.f32.mrb[0].mxu0
    %v662 = vadd.f32 0.0, %v661
    %v663 = vpop.f32.mrb[0].mxu0
    %664 = vmatprep.mubr.bf16.mxu0 0
    %665 = vmatmul.mubr.bf16.gmra.mrb[0].mxu0 %v401
    %v666 = vpop.f32.mrb[0].mxu0
    %v667 = vadd.f32 0.0, %v666
    %v668 = vpop.f32.mrb[0].mxu0
    %v669 = vpop.f32.mrb[0].mxu0
    %v670 = vadd.f32 0.0, %v669
    %v671 = vpop.f32.mrb[0].mxu0
    %672 = vmatprep.mubr.bf16.mxu0 0
    %673 = vmatmul.mubr.bf16.gmra.mrb[0].mxu0 %v402
    %v674 = vpop.f32.mrb[0].mxu0
    %v675 = vadd.f32 0.0, %v674
    %v676 = vpop.f32.mrb[0].mxu0
    %v677 = vpop.f32.mrb[0].mxu0
    %v678 = vadd.f32 0.0, %v677
    %v679 = vpop.f32.mrb[0].mxu0
    %680 = vmatprep.mubr.bf16.mxu0 0
    %681 = vmatmul.mubr.bf16.gmra.mrb[0].mxu0 %v403
    %v682 = vpop.f32.mrb[0].mxu0
    %v683 = vadd.f32 0.0, %v682
    %v684 = vpop.f32.mrb[0].mxu0
    %v685 = vpop.f32.mrb[0].mxu0
    %v686 = vadd.f32 0.0, %v685
    %v687 = vpop.f32.mrb[0].mxu0
    %688 = vmatprep.mubr.bf16.mxu0 0
    %689 = vmatmul.mubr.bf16.gmra.mrb[0].mxu0 %v404
    %v690 = vpop.f32.mrb[0].mxu0
    %v691 = vadd.f32 0.0, %v690
    %v692 = vpop.f32.mrb[0].mxu0
    %v693 = vpop.f32.mrb[0].mxu0
    %v694 = vadd.f32 0.0, %v693
    %v695 = vpop.f32.mrb[0].mxu0
    %696 = vmatprep.mubr.bf16.mxu0 0
    %697 = vmatmul.mubr.bf16.gmra.mrb[0].mxu0 %v405
    %v698 = vpop.f32.mrb[0].mxu0
    %v699 = vadd.f32 0.0, %v698
    %v700 = vpop.f32.mrb[0].mxu0
    %v701 = vpop.f32.mrb[0].mxu0
    %v702 = vadd.f32 0.0, %v701
    %v703 = vpop.f32.mrb[0].mxu0
    %704 = vmatprep.mubr.bf16.mxu0 0
    %705 = vmatmul.mubr.bf16.gmra.mrb[0].mxu0 %v406
    %v706 = vpop.f32.mrb[0].mxu0
    %v707 = vadd.f32 0.0, %v706
    %v708 = vpop.f32.mrb[0].mxu0
    %v709 = vpop.f32.mrb[0].mxu0
    %v710 = vadd.f32 0.0, %v709
    %v711 = vpop.f32.mrb[0].mxu0
    %712 = vmatprep.mubr.bf16.mxu0 0
    %713 = vmatmul.mubr.bf16.gmra.mrb[0].mxu0 %v407
    %v714 = vpop.f32.mrb[0].mxu0
    %v715 = vadd.f32 0.0, %v714
    %v716 = vpop.f32.mrb[0].mxu0
    %v717 = vpop.f32.mrb[0].mxu0
    %v718 = vadd.f32 0.0, %v717
    %v719 = vpop.f32.mrb[0].mxu0
    %720 = vmatprep.mubr.bf16.mxu0 0
    %721 = vmatmul.mubr.bf16.gmra.mrb[0].mxu0 %v408
    %v722 = vpop.f32.mrb[0].mxu0
    %v723 = vadd.f32 0.0, %v722
    %v724 = vpop.f32.mrb[0].mxu0
    %v725 = vpop.f32.mrb[0].mxu0
    %v726 = vadd.f32 0.0, %v725
    %v727 = vpop.f32.mrb[0].mxu0
    %728 = vmatprep.mubr.bf16.mxu0 0
    %729 = vmatmul.mubr.bf16.gmra.mrb[0].mxu0 %v409
    %v730 = vpop.f32.mrb[0].mxu0
    %v731 = vadd.f32 0.0, %v730
    %v732 = vpop.f32.mrb[0].mxu0
    %v733 = vpop.f32.mrb[0].mxu0
    %v734 = vadd.f32 0.0, %v733
    %v735 = vpop.f32.mrb[0].mxu0
    %736 = vmatprep.mubr.bf16.mxu0 0
    %737 = vmatmul.mubr.bf16.gmra.mrb[0].mxu0 %v410
    %v738 = vpop.f32.mrb[0].mxu0
    %v739 = vadd.f32 0.0, %v738
    %v740 = vpop.f32.mrb[0].mxu0
    %v741 = vpop.f32.mrb[0].mxu0
    %v742 = vadd.f32 0.0, %v741
    %v743 = vpop.f32.mrb[0].mxu0
    %744 = vmatprep.mubr.bf16.mxu0 0
    %745 = vmatmul.mubr.bf16.gmra.mrb[0].mxu0 %v411
    %v746 = vpop.f32.mrb[0].mxu0
    %v747 = vadd.f32 0.0, %v746
    %v748 = vpop.f32.mrb[0].mxu0
    %v749 = vpop.f32.mrb[0].mxu0
    %v750 = vadd.f32 0.0, %v749
    %v751 = vpop.f32.mrb[0].mxu0
    %752 = vmatprep.mubr.bf16.mxu0 0
    %753 = vmatmul.mubr.bf16.gmra.mrb[0].mxu0 %v412
    %v754 = vpop.f32.mrb[0].mxu0
    %v755 = vadd.f32 0.0, %v754
    %v756 = vpop.f32.mrb[0].mxu0
    %v757 = vpop.f32.mrb[0].mxu0
    %v758 = vadd.f32 0.0, %v757
    %v759 = vpop.f32.mrb[0].mxu0
    %760 = vmatprep.mubr.bf16.mxu0 0
    %761 = vmatmul.mubr.bf16.gmra.mrb[0].mxu0 %v413
    %v762 = vpop.f32.mrb[0].mxu0
    %v763 = vadd.f32 0.0, %v762
    %v764 = vpop.f32.mrb[0].mxu0
    %v765 = vpop.f32.mrb[0].mxu0
    %v766 = vadd.f32 0.0, %v765
    %v767 = vpop.f32.mrb[0].mxu0
    %768 = vmatprep.mubr.bf16.mxu0 0
    %769 = vmatmul.mubr.bf16.gmra.mrb[0].mxu0 %v414
    %v770 = vpop.f32.mrb[0].mxu0
    %v771 = vadd.f32 0.0, %v770
    %v772 = vpop.f32.mrb[0].mxu0
    %v773 = vpop.f32.mrb[0].mxu0
    %v774 = vadd.f32 0.0, %v773
    %v775 = vpop.f32.mrb[0].mxu0
    %776 = vmatprep.mubr.bf16.mxu0 0
    %777 = vmatmul.mubr.bf16.gmra.mrb[0].mxu0 %v415
    %v778 = vpop.f32.mrb[0].mxu0
    %v779 = vadd.f32 0.0, %v778
    %v780 = vpop.f32.mrb[0].mxu0
    %v781 = vpop.f32.mrb[0].mxu0
    %v782 = vadd.f32 0.0, %v781
    %v783 = vpop.f32.mrb[0].mxu0
    %784 = vdwg.mxu0
    %v785 = vadd.f32 %v112, %v531
    %v786 = vadd.f32 %v113, %v534
    %v787 = vadd.f32 %v114, %v539
    %v788 = vadd.f32 %v115, %v542
    %v789 = vadd.f32 %v116, %v547
    %v790 = vadd.f32 %v117, %v550
    %v791 = vadd.f32 %v118, %v555
    %v792 = vadd.f32 %v119, %v558
    %v793 = vadd.f32 %v120, %v563
    %v794 = vadd.f32 %v121, %v566
    %v795 = vadd.f32 %v122, %v571
    %v796 = vadd.f32 %v123, %v574
    %v797 = vadd.f32 %v124, %v579
    %v798 = vadd.f32 %v125, %v582
    %v799 = vadd.f32 %v126, %v587
    %v800 = vadd.f32 %v127, %v590
    %v801 = vadd.f32 %v128, %v595
    %v802 = vadd.f32 %v129, %v598
    %v803 = vadd.f32 %v130, %v603
    %v804 = vadd.f32 %v131, %v606
    %v805 = vadd.f32 %v132, %v611
    %v806 = vadd.f32 %v133, %v614
    %v807 = vadd.f32 %v134, %v619
    %v808 = vadd.f32 %v135, %v622
    %v809 = vadd.f32 %v136, %v627
    %v810 = vadd.f32 %v137, %v630
    %v811 = vadd.f32 %v138, %v635
    %v812 = vadd.f32 %v139, %v638
    %v813 = vadd.f32 %v140, %v643
    %v814 = vadd.f32 %v141, %v646
    %v815 = vadd.f32 %v142, %v651
    %v816 = vadd.f32 %v143, %v654
    %v817 = vadd.f32 %v144, %v659
    %v818 = vadd.f32 %v145, %v662
    %v819 = vadd.f32 %v146, %v667
    %v820 = vadd.f32 %v147, %v670
    %v821 = vadd.f32 %v148, %v675
    %v822 = vadd.f32 %v149, %v678
    %v823 = vadd.f32 %v150, %v683
    %v824 = vadd.f32 %v151, %v686
    %v825 = vadd.f32 %v152, %v691
    %v826 = vadd.f32 %v153, %v694
    %v827 = vadd.f32 %v154, %v699
    %v828 = vadd.f32 %v155, %v702
    %v829 = vadd.f32 %v156, %v707
    %v830 = vadd.f32 %v157, %v710
    %v831 = vadd.f32 %v158, %v715
    %v832 = vadd.f32 %v159, %v718
    %v833 = vadd.f32 %v160, %v723
    %v834 = vadd.f32 %v161, %v726
    %v835 = vadd.f32 %v162, %v731
    %v836 = vadd.f32 %v163, %v734
    %v837 = vadd.f32 %v164, %v739
    %v838 = vadd.f32 %v165, %v742
    %v839 = vadd.f32 %v166, %v747
    %v840 = vadd.f32 %v167, %v750
    %v841 = vadd.f32 %v168, %v755
    %v842 = vadd.f32 %v169, %v758
    %v843 = vadd.f32 %v170, %v763
    %v844 = vadd.f32 %v171, %v766
    %v845 = vadd.f32 %v172, %v771
    %v846 = vadd.f32 %v173, %v774
    %v847 = vadd.f32 %v174, %v779
    %v848 = vadd.f32 %v175, %v782
    %849 = vst [vmem:[#allocation2] sm:$0xff] %v785
    %850 = vst [vmem:[#allocation2 + $0x8] sm:$0xff] %v786
    %851 = vst [vmem:[#allocation2 + $0x10] sm:$0xff] %v787
    %852 = vst [vmem:[#allocation2 + $0x18] sm:$0xff] %v788
    %853 = vst [vmem:[#allocation2 + $0x20] sm:$0xff] %v789
    %854 = vst [vmem:[#allocation2 + $0x28] sm:$0xff] %v790
    %855 = vst [vmem:[#allocation2 + $0x30] sm:$0xff] %v791
    %856 = vst [vmem:[#allocation2 + $0x38] sm:$0xff] %v792
    %857 = vst [vmem:[#allocation2 + $0x40] sm:$0xff] %v793
    %858 = vst [vmem:[#allocation2 + $0x48] sm:$0xff] %v794
    %859 = vst [vmem:[#allocation2 + $0x50] sm:$0xff] %v795
    %860 = vst [vmem:[#allocation2 + $0x58] sm:$0xff] %v796
    %861 = vst [vmem:[#allocation2 + $0x60] sm:$0xff] %v797
    %862 = vst [vmem:[#allocation2 + $0x68] sm:$0xff] %v798
    %863 = vst [vmem:[#allocation2 + $0x70] sm:$0xff] %v799
    %864 = vst [vmem:[#allocation2 + $0x78] sm:$0xff] %v800
    %865 = vst [vmem:[#allocation2 + $0x80] sm:$0xff] %v801
    %866 = vst [vmem:[#allocation2 + $0x88] sm:$0xff] %v802
    %867 = vst [vmem:[#allocation2 + $0x90] sm:$0xff] %v803
    %868 = vst [vmem:[#allocation2 + $0x98] sm:$0xff] %v804
    %869 = vst [vmem:[#allocation2 + $0xa0] sm:$0xff] %v805
    %870 = vst [vmem:[#allocation2 + $0xa8] sm:$0xff] %v806
    %871 = vst [vmem:[#allocation2 + $0xb0] sm:$0xff] %v807
    %872 = vst [vmem:[#allocation2 + $0xb8] sm:$0xff] %v808
    %873 = vst [vmem:[#allocation2 + $0xc0] sm:$0xff] %v809
    %874 = vst [vmem:[#allocation2 + $0xc8] sm:$0xff] %v810
    %875 = vst [vmem:[#allocation2 + $0xd0] sm:$0xff] %v811
    %876 = vst [vmem:[#allocation2 + $0xd8] sm:$0xff] %v812
    %877 = vst [vmem:[#allocation2 + $0xe0] sm:$0xff] %v813
    %878 = vst [vmem:[#allocation2 + $0xe8] sm:$0xff] %v814
    %879 = vst [vmem:[#allocation2 + $0xf0] sm:$0xff] %v815
    %880 = vst [vmem:[#allocation2 + $0xf8] sm:$0xff] %v816
    %881 = vst [vmem:[#allocation2 + $0x100] sm:$0xff] %v817
    %882 = vst [vmem:[#allocation2 + $0x108] sm:$0xff] %v818
    %883 = vst [vmem:[#allocation2 + $0x110] sm:$0xff] %v819
    %884 = vst [vmem:[#allocation2 + $0x118] sm:$0xff] %v820
    %885 = vst [vmem:[#allocation2 + $0x120] sm:$0xff] %v821
    %886 = vst [vmem:[#allocation2 + $0x128] sm:$0xff] %v822
    %887 = vst [vmem:[#allocation2 + $0x130] sm:$0xff] %v823
    %888 = vst [vmem:[#allocation2 + $0x138] sm:$0xff] %v824
    %889 = vst [vmem:[#allocation2 + $0x140] sm:$0xff] %v825
    %890 = vst [vmem:[#allocation2 + $0x148] sm:$0xff] %v826
    %891 = vst [vmem:[#allocation2 + $0x150] sm:$0xff] %v827
    %892 = vst [vmem:[#allocation2 + $0x158] sm:$0xff] %v828
    %893 = vst [vmem:[#allocation2 + $0x160] sm:$0xff] %v829
    %894 = vst [vmem:[#allocation2 + $0x168] sm:$0xff] %v830
    %895 = vst [vmem:[#allocation2 + $0x170] sm:$0xff] %v831
    %896 = vst [vmem:[#allocation2 + $0x178] sm:$0xff] %v832
    %897 = vst [vmem:[#allocation2 + $0x180] sm:$0xff] %v833
    %898 = vst [vmem:[#allocation2 + $0x188] sm:$0xff] %v834
    %899 = vst [vmem:[#allocation2 + $0x190] sm:$0xff] %v835
    %900 = vst [vmem:[#allocation2 + $0x198] sm:$0xff] %v836
    %901 = vst [vmem:[#allocation2 + $0x1a0] sm:$0xff] %v837
    %902 = vst [vmem:[#allocation2 + $0x1a8] sm:$0xff] %v838
    %903 = vst [vmem:[#allocation2 + $0x1b0] sm:$0xff] %v839
    %904 = vst [vmem:[#allocation2 + $0x1b8] sm:$0xff] %v840
    %905 = vst [vmem:[#allocation2 + $0x1c0] sm:$0xff] %v841
    %906 = vst [vmem:[#allocation2 + $0x1c8] sm:$0xff] %v842
    %907 = vst [vmem:[#allocation2 + $0x1d0] sm:$0xff] %v843
    %908 = vst [vmem:[#allocation2 + $0x1d8] sm:$0xff] %v844
    %909 = vst [vmem:[#allocation2 + $0x1e0] sm:$0xff] %v845
    %910 = vst [vmem:[#allocation2 + $0x1e8] sm:$0xff] %v846
    %911 = vst [vmem:[#allocation2 + $0x1f0] sm:$0xff] %v847
    %912 = vst [vmem:[#allocation2 + $0x1f8] sm:$0xff] %v848
    // Predicated region
    $region26: #{tpu_custom_call.1} parent=1 // pred_check
      %p913 = pneg %p44
    $region27: #{tpu_custom_call.1} parent=1 // pred_check_branch
      %915 = sbr.rel (%p913) target = $region29
    $region28: #{tpu_custom_call.1} parent=1 // pred_region
      %v916 = vld [vmem:[#allocation2] sm:$0xff]
      %v917 = vld [vmem:[#allocation2 + $0x8] sm:$0xff]
      %v918 = vld [vmem:[#allocation2 + $0x10] sm:$0xff]
      %v919 = vld [vmem:[#allocation2 + $0x18] sm:$0xff]
      %v920 = vld [vmem:[#allocation2 + $0x20] sm:$0xff]
      %v921 = vld [vmem:[#allocation2 + $0x28] sm:$0xff]
      %v922 = vld [vmem:[#allocation2 + $0x30] sm:$0xff]
      %v923 = vld [vmem:[#allocation2 + $0x38] sm:$0xff]
      %v924 = vld [vmem:[#allocation2 + $0x40] sm:$0xff]
      %v925 = vld [vmem:[#allocation2 + $0x48] sm:$0xff]
      %v926 = vld [vmem:[#allocation2 + $0x50] sm:$0xff]
      %v927 = vld [vmem:[#allocation2 + $0x58] sm:$0xff]
      %v928 = vld [vmem:[#allocation2 + $0x60] sm:$0xff]
      %v929 = vld [vmem:[#allocation2 + $0x68] sm:$0xff]
      %v930 = vld [vmem:[#allocation2 + $0x70] sm:$0xff]
      %v931 = vld [vmem:[#allocation2 + $0x78] sm:$0xff]
      %v932 = vld [vmem:[#allocation2 + $0x80] sm:$0xff]
      %v933 = vld [vmem:[#allocation2 + $0x88] sm:$0xff]
      %v934 = vld [vmem:[#allocation2 + $0x90] sm:$0xff]
      %v935 = vld [vmem:[#allocation2 + $0x98] sm:$0xff]
      %v936 = vld [vmem:[#allocation2 + $0xa0] sm:$0xff]
      %v937 = vld [vmem:[#allocation2 + $0xa8] sm:$0xff]
      %v938 = vld [vmem:[#allocation2 + $0xb0] sm:$0xff]
      %v939 = vld [vmem:[#allocation2 + $0xb8] sm:$0xff]
      %v940 = vld [vmem:[#allocation2 + $0xc0] sm:$0xff]
      %v941 = vld [vmem:[#allocation2 + $0xc8] sm:$0xff]
      %v942 = vld [vmem:[#allocation2 + $0xd0] sm:$0xff]
      %v943 = vld [vmem:[#allocation2 + $0xd8] sm:$0xff]
      %v944 = vld [vmem:[#allocation2 + $0xe0] sm:$0xff]
      %v945 = vld [vmem:[#allocation2 + $0xe8] sm:$0xff]
      %v946 = vld [vmem:[#allocation2 + $0xf0] sm:$0xff]
      %v947 = vld [vmem:[#allocation2 + $0xf8] sm:$0xff]
      %v948 = vld [vmem:[#allocation2 + $0x100] sm:$0xff]
      %v949 = vld [vmem:[#allocation2 + $0x108] sm:$0xff]
      %v950 = vld [vmem:[#allocation2 + $0x110] sm:$0xff]
      %v951 = vld [vmem:[#allocation2 + $0x118] sm:$0xff]
      %v952 = vld [vmem:[#allocation2 + $0x120] sm:$0xff]
      %v953 = vld [vmem:[#allocation2 + $0x128] sm:$0xff]
      %v954 = vld [vmem:[#allocation2 + $0x130] sm:$0xff]
      %v955 = vld [vmem:[#allocation2 + $0x138] sm:$0xff]
      %v956 = vld [vmem:[#allocation2 + $0x140] sm:$0xff]
      %v957 = vld [vmem:[#allocation2 + $0x148] sm:$0xff]
      %v958 = vld [vmem:[#allocation2 + $0x150] sm:$0xff]
      %v959 = vld [vmem:[#allocation2 + $0x158] sm:$0xff]
      %v960 = vld [vmem:[#allocation2 + $0x160] sm:$0xff]
      %v961 = vld [vmem:[#allocation2 + $0x168] sm:$0xff]
      %v962 = vld [vmem:[#allocation2 + $0x170] sm:$0xff]
      %v963 = vld [vmem:[#allocation2 + $0x178] sm:$0xff]
      %v964 = vld [vmem:[#allocation2 + $0x180] sm:$0xff]
      %v965 = vld [vmem:[#allocation2 + $0x188] sm:$0xff]
      %v966 = vld [vmem:[#allocation2 + $0x190] sm:$0xff]
      %v967 = vld [vmem:[#allocation2 + $0x198] sm:$0xff]
      %v968 = vld [vmem:[#allocation2 + $0x1a0] sm:$0xff]
      %v969 = vld [vmem:[#allocation2 + $0x1a8] sm:$0xff]
      %v970 = vld [vmem:[#allocation2 + $0x1b0] sm:$0xff]
      %v971 = vld [vmem:[#allocation2 + $0x1b8] sm:$0xff]
      %v972 = vld [vmem:[#allocation2 + $0x1c0] sm:$0xff]
      %v973 = vld [vmem:[#allocation2 + $0x1c8] sm:$0xff]
      %v974 = vld [vmem:[#allocation2 + $0x1d0] sm:$0xff]
      %v975 = vld [vmem:[#allocation2 + $0x1d8] sm:$0xff]
      %v976 = vld [vmem:[#allocation2 + $0x1e0] sm:$0xff]
      %v977 = vld [vmem:[#allocation2 + $0x1e8] sm:$0xff]
      %v978 = vld [vmem:[#allocation2 + $0x1f0] sm:$0xff]
      %v979 = vld [vmem:[#allocation2 + $0x1f8] sm:$0xff]
      %v980 = vld [vmem:[%s2] sm:$0x1]
      %v982 = vlaneseq
      %v983 = vshrl.u32 %v982, 7
      %v984 = vsub.s32 0, %v983
      %v985 = vrot.slane %v980, %v984
      %v987 = vadd.f32 %v916, %v985
      %v988 = vadd.f32 %v917, %v985
      %v989 = vadd.f32 %v918, %v985
      %v990 = vadd.f32 %v919, %v985
      %v991 = vadd.f32 %v920, %v985
      %v992 = vadd.f32 %v921, %v985
      %v993 = vadd.f32 %v922, %v985
      %v994 = vadd.f32 %v923, %v985
      %v995 = vadd.f32 %v924, %v985
      %v996 = vadd.f32 %v925, %v985
      %v997 = vadd.f32 %v926, %v985
      %v998 = vadd.f32 %v927, %v985
      %v999 = vadd.f32 %v928, %v985
      %v1000 = vadd.f32 %v929, %v985
      %v1001 = vadd.f32 %v930, %v985
      %v1002 = vadd.f32 %v931, %v985
      %v1003 = vadd.f32 %v932, %v985
      %v1004 = vadd.f32 %v933, %v985
      %v1005 = vadd.f32 %v934, %v985
      %v1006 = vadd.f32 %v935, %v985
      %v1007 = vadd.f32 %v936, %v985
      %v1008 = vadd.f32 %v937, %v985
      %v1009 = vadd.f32 %v938, %v985
      %v1010 = vadd.f32 %v939, %v985
      %v1011 = vadd.f32 %v940, %v985
      %v1012 = vadd.f32 %v941, %v985
      %v1013 = vadd.f32 %v942, %v985
      %v1014 = vadd.f32 %v943, %v985
      %v1015 = vadd.f32 %v944, %v985
      %v1016 = vadd.f32 %v945, %v985
      %v1017 = vadd.f32 %v946, %v985
      %v1018 = vadd.f32 %v947, %v985
      %v1019 = vadd.f32 %v948, %v985
      %v1020 = vadd.f32 %v949, %v985
      %v1021 = vadd.f32 %v950, %v985
      %v1022 = vadd.f32 %v951, %v985
      %v1023 = vadd.f32 %v952, %v985
      %v1024 = vadd.f32 %v953, %v985
      %v1025 = vadd.f32 %v954, %v985
      %v1026 = vadd.f32 %v955, %v985
      %v1027 = vadd.f32 %v956, %v985
      %v1028 = vadd.f32 %v957, %v985
      %v1029 = vadd.f32 %v958, %v985
      %v1030 = vadd.f32 %v959, %v985
      %v1031 = vadd.f32 %v960, %v985
      %v1032 = vadd.f32 %v961, %v985
      %v1033 = vadd.f32 %v962, %v985
      %v1034 = vadd.f32 %v963, %v985
      %v1035 = vadd.f32 %v964, %v985
      %v1036 = vadd.f32 %v965, %v985
      %v1037 = vadd.f32 %v966, %v985
      %v1038 = vadd.f32 %v967, %v985
      %v1039 = vadd.f32 %v968, %v985
      %v1040 = vadd.f32 %v969, %v985
      %v1041 = vadd.f32 %v970, %v985
      %v1042 = vadd.f32 %v971, %v985
      %v1043 = vadd.f32 %v972, %v985
      %v1044 = vadd.f32 %v973, %v985
      %v1045 = vadd.f32 %v974, %v985
      %v1046 = vadd.f32 %v975, %v985
      %v1047 = vadd.f32 %v976, %v985
      %v1048 = vadd.f32 %v977, %v985
      %v1049 = vadd.f32 %v978, %v985
      %v1050 = vadd.f32 %v979, %v985
      %1051 = vst [vmem:[#allocation8] sm:$0xff] %v987
      %1052 = vst [vmem:[#allocation8 + $0x8] sm:$0xff] %v988
      %1053 = vst [vmem:[#allocation8 + $0x10] sm:$0xff] %v989
      %1054 = vst [vmem:[#allocation8 + $0x18] sm:$0xff] %v990
      %1055 = vst [vmem:[#allocation8 + $0x20] sm:$0xff] %v991
      %1056 = vst [vmem:[#allocation8 + $0x28] sm:$0xff] %v992
      %1057 = vst [vmem:[#allocation8 + $0x30] sm:$0xff] %v993
      %1058 = vst [vmem:[#allocation8 + $0x38] sm:$0xff] %v994
      %1059 = vst [vmem:[#allocation8 + $0x40] sm:$0xff] %v995
      %1060 = vst [vmem:[#allocation8 + $0x48] sm:$0xff] %v996
      %1061 = vst [vmem:[#allocation8 + $0x50] sm:$0xff] %v997
      %1062 = vst [vmem:[#allocation8 + $0x58] sm:$0xff] %v998
      %1063 = vst [vmem:[#allocation8 + $0x60] sm:$0xff] %v999
      %1064 = vst [vmem:[#allocation8 + $0x68] sm:$0xff] %v1000
      %1065 = vst [vmem:[#allocation8 + $0x70] sm:$0xff] %v1001
      %1066 = vst [vmem:[#allocation8 + $0x78] sm:$0xff] %v1002
      %1067 = vst [vmem:[#allocation8 + $0x80] sm:$0xff] %v1003
      %1068 = vst [vmem:[#allocation8 + $0x88] sm:$0xff] %v1004
      %1069 = vst [vmem:[#allocation8 + $0x90] sm:$0xff] %v1005
      %1070 = vst [vmem:[#allocation8 + $0x98] sm:$0xff] %v1006
      %1071 = vst [vmem:[#allocation8 + $0xa0] sm:$0xff] %v1007
      %1072 = vst [vmem:[#allocation8 + $0xa8] sm:$0xff] %v1008
      %1073 = vst [vmem:[#allocation8 + $0xb0] sm:$0xff] %v1009
      %1074 = vst [vmem:[#allocation8 + $0xb8] sm:$0xff] %v1010
      %1075 = vst [vmem:[#allocation8 + $0xc0] sm:$0xff] %v1011
      %1076 = vst [vmem:[#allocation8 + $0xc8] sm:$0xff] %v1012
      %1077 = vst [vmem:[#allocation8 + $0xd0] sm:$0xff] %v1013
      %1078 = vst [vmem:[#allocation8 + $0xd8] sm:$0xff] %v1014
      %1079 = vst [vmem:[#allocation8 + $0xe0] sm:$0xff] %v1015
      %1080 = vst [vmem:[#allocation8 + $0xe8] sm:$0xff] %v1016
      %1081 = vst [vmem:[#allocation8 + $0xf0] sm:$0xff] %v1017
      %1082 = vst [vmem:[#allocation8 + $0xf8] sm:$0xff] %v1018
      %1083 = vst [vmem:[#allocation8 + $0x100] sm:$0xff] %v1019
      %1084 = vst [vmem:[#allocation8 + $0x108] sm:$0xff] %v1020
      %1085 = vst [vmem:[#allocation8 + $0x110] sm:$0xff] %v1021
      %1086 = vst [vmem:[#allocation8 + $0x118] sm:$0xff] %v1022
      %1087 = vst [vmem:[#allocation8 + $0x120] sm:$0xff] %v1023
      %1088 = vst [vmem:[#allocation8 + $0x128] sm:$0xff] %v1024
      %1089 = vst [vmem:[#allocation8 + $0x130] sm:$0xff] %v1025
      %1090 = vst [vmem:[#allocation8 + $0x138] sm:$0xff] %v1026
      %1091 = vst [vmem:[#allocation8 + $0x140] sm:$0xff] %v1027
      %1092 = vst [vmem:[#allocation8 + $0x148] sm:$0xff] %v1028
      %1093 = vst [vmem:[#allocation8 + $0x150] sm:$0xff] %v1029
      %1094 = vst [vmem:[#allocation8 + $0x158] sm:$0xff] %v1030
      %1095 = vst [vmem:[#allocation8 + $0x160] sm:$0xff] %v1031
      %1096 = vst [vmem:[#allocation8 + $0x168] sm:$0xff] %v1032
      %1097 = vst [vmem:[#allocation8 + $0x170] sm:$0xff] %v1033
      %1098 = vst [vmem:[#allocation8 + $0x178] sm:$0xff] %v1034
      %1099 = vst [vmem:[#allocation8 + $0x180] sm:$0xff] %v1035
      %1100 = vst [vmem:[#allocation8 + $0x188] sm:$0xff] %v1036
      %1101 = vst [vmem:[#allocation8 + $0x190] sm:$0xff] %v1037
      %1102 = vst [vmem:[#allocation8 + $0x198] sm:$0xff] %v1038
      %1103 = vst [vmem:[#allocation8 + $0x1a0] sm:$0xff] %v1039
      %1104 = vst [vmem:[#allocation8 + $0x1a8] sm:$0xff] %v1040
      %1105 = vst [vmem:[#allocation8 + $0x1b0] sm:$0xff] %v1041
      %1106 = vst [vmem:[#allocation8 + $0x1b8] sm:$0xff] %v1042
      %1107 = vst [vmem:[#allocation8 + $0x1c0] sm:$0xff] %v1043
      %1108 = vst [vmem:[#allocation8 + $0x1c8] sm:$0xff] %v1044
      %1109 = vst [vmem:[#allocation8 + $0x1d0] sm:$0xff] %v1045
      %1110 = vst [vmem:[#allocation8 + $0x1d8] sm:$0xff] %v1046
      %1111 = vst [vmem:[#allocation8 + $0x1e0] sm:$0xff] %v1047
      %1112 = vst [vmem:[#allocation8 + $0x1e8] sm:$0xff] %v1048
      %1113 = vst [vmem:[#allocation8 + $0x1f0] sm:$0xff] %v1049
      %1114 = vst [vmem:[#allocation8 + $0x1f8] sm:$0xff] %v1050
    $region29: #{tpu_custom_call.1} parent=1 // pred_fallthru
      _
    // Predicated region
    $region30: #{tpu_custom_call.1} parent=1 // pred_check
      _
    $region31: #{tpu_custom_call.1} parent=1 // pred_check_branch
      %1116 = sbr.rel (0) target = $region33
    $region32: #{tpu_custom_call.1} parent=1 // pred_region
      %s1118 = ssub.s32 8192, 8192
      %1119 = vsyncadd [#allocation5], %s1118
      %s1120 = sshll.u32 [#allocation8], 4
      %s1121 = int_to_ptr.vmem [resolvable:$true] %s1120
      %1126 = dma.vmem_to_hbm [thread:$0]  %s1121, 8192, %s3, [#allocation5], 128, 128, 8
    $region33: #{tpu_custom_call.1} parent=1 // pred_fallthru
      _
    // Predicated region
    $region34: #{tpu_custom_call.1} parent=1 // pred_check
      _
    $region35: #{tpu_custom_call.1} parent=1 // pred_check_branch
      %1128 = sbr.rel (0) target = $region37
    $region36: #{tpu_custom_call.1} parent=1 // pred_region
      %1129 = dma.done [#allocation5], 8192
    $region37: #{tpu_custom_call.1} parent=1 // pred_fallthru
      _
    %1130 = vsyncpa [#allocation4], 1
    %1131 = vsyncpa [#allocation7], 1
    %1132 = vsyncpa [#allocation5], 1

</llo_original>
